<compile_context>
chip_gen: v5e
topology: v5e:2x2
jax: 0.10.0
libtpu: 0.0.40
codegen_flags: <defaults>
</compile_context>

<pallas_src>
import numpy as np
import jax
import jax.numpy as jnp
from jax.experimental import pallas as pl
from jax.experimental.pallas import tpu as pltpu


def _round_up(x, m):
    return ((x + m - 1) // m) * m


# ----------------------- batched matmul + bias (value_proj) -----------------------
def _bmm_bias_kernel(x_ref, w_ref, b_ref, o_ref):
    acc = jnp.dot(x_ref[...], w_ref[...], preferred_element_type=jnp.float32)
    o_ref[...] = (acc + b_ref[...].astype(jnp.float32)).astype(o_ref.dtype)


def batched_matmul_bias(x, w, b, tile=512):
    """x: [B, L, Din], w: [Din, Dout], b: [Dout] -> [B, Lp, Dout] (Lp = L rounded up to tile)."""
    B, L, Din = x.shape
    Dout = w.shape[1]
    tile = min(tile, _round_up(L, 8))
    Lp = _round_up(L, tile)
    if Lp != L:
        x = jnp.pad(x, ((0, 0), (0, Lp - L), (0, 0)))
    return pl.pallas_call(
        _bmm_bias_kernel,
        out_shape=jax.ShapeDtypeStruct((B, Lp, Dout), x.dtype),
        grid=(B, Lp // tile),
        in_specs=[pl.BlockSpec((None, tile, Din), lambda b_, i: (b_, i, 0)),
                  pl.BlockSpec((Din, Dout), lambda b_, i: (0, 0)),
                  pl.BlockSpec((1, Dout), lambda b_, i: (0, 0))],
        out_specs=pl.BlockSpec((None, tile, Dout), lambda b_, i: (b_, i, 0)),
        compiler_params=pltpu.CompilerParams(
            dimension_semantics=("parallel", "parallel")),
    )(x, w, b.reshape(1, Dout))


# --------- fused sampling_offsets + attention_weights projection (+ softmax) ---------
def _make_fused_qproj_kernel(n_off, nh, gp):
    half = n_off // 2

    def kernel(x_ref, w_ref, b_ref, ref_ref, inv_ref, loc_ref, attn_ref):
        acc = jnp.dot(x_ref[...], w_ref[...], preferred_element_type=jnp.float32)
        acc = acc + b_ref[...].astype(jnp.float32)
        # sampling locations: ref + offset / normalizer; lanes are ordered (xy, head, lvl, point)
        off = acc[:, :n_off]
        inv = inv_ref[...].astype(jnp.float32)
        rx = ref_ref[:, 0:1].astype(jnp.float32)
        ry = ref_ref[:, 1:2].astype(jnp.float32)
        loc_ref[...] = jnp.concatenate(
            [off[:, :half] * inv[:, :half] + rx,
             off[:, half:] * inv[:, half:] + ry], axis=1).astype(loc_ref.dtype)
        # attention weights: per-head softmax over the n_freqs*n_levels*n_points logits
        logits = acc[:, n_off:]
        segs = []
        for h in range(nh):
            seg = logits[:, h * gp:(h + 1) * gp]
            m = jnp.max(seg, axis=-1, keepdims=True)
            e = jnp.exp(seg - m)
            s = jnp.sum(e, axis=-1, keepdims=True)
            segs.append(e * pl.reciprocal(s, approx=True))
        attn_ref[...] = jnp.concatenate(segs, axis=1).astype(attn_ref.dtype)

    return kernel


def fused_query_proj(q, refp, w_cat, b_cat, inv_norm, *, n_off, nh, gp, tile):
    """q: [B, Lqp, D], refp: [B, Lqp, 2] -> (loc [B, Lqp, n_off], attn [B, Lqp, n_attn])."""
    B, Lqp, D = q.shape
    Ncat = w_cat.shape[1]
    n_attn = Ncat - n_off
    kernel = _make_fused_qproj_kernel(n_off, nh, gp)
    return pl.pallas_call(
        kernel,
        out_shape=(jax.ShapeDtypeStruct((B, Lqp, n_off), jnp.float32),
                   jax.ShapeDtypeStruct((B, Lqp, n_attn), jnp.float32)),
        grid=(B, Lqp // tile),
        in_specs=[pl.BlockSpec((None, tile, D), lambda b_, i: (b_, i, 0)),
                  pl.BlockSpec((D, Ncat), lambda b_, i: (0, 0)),
                  pl.BlockSpec((1, Ncat), lambda b_, i: (0, 0)),
                  pl.BlockSpec((None, tile, 2), lambda b_, i: (b_, i, 0)),
                  pl.BlockSpec((1, n_off), lambda b_, i: (0, 0))],
        out_specs=(pl.BlockSpec((None, tile, n_off), lambda b_, i: (b_, i, 0)),
                   pl.BlockSpec((None, tile, n_attn), lambda b_, i: (b_, i, 0))),
        compiler_params=pltpu.CompilerParams(
            dimension_semantics=("parallel", "parallel")),
    )(q, w_cat, b_cat.reshape(1, Ncat), refp, inv_norm)


# ---------------- deformable aggregation (+ fused output projection) ----------------
def _make_deform_kernel(Hs, Ws, starts, nh, hd, LL, P, agg_dtype):
    half = nh * LL * P   # x lanes first, y lanes second

    def kernel(val_ref, loc_ref, attn_ref, wout_ref, bout_ref, o_ref):
        tq = loc_ref.shape[0]
        loc = loc_ref[...].astype(jnp.float32)     # [tq, 2*nh*LL*P], lanes (xy, head, lvl, point)
        attn = attn_ref[...].astype(jnp.float32)   # [tq, nh*LL*P],   lanes (head, lvl, point)
        accs = [jnp.zeros((tq, hd), jnp.float32) for _ in range(nh)]
        for l in range(LL):                                           # static unroll over levels
            H, W, s = Hs[l], Ws[l], starts[l]
            HW = H * W
            v_l = val_ref[s:s + HW, :].astype(agg_dtype)              # [HW, D], all heads
            r_iota = jax.lax.broadcasted_iota(jnp.int32, (tq, P, H), 2)
            c_iota = jax.lax.broadcasted_iota(jnp.int32, (tq, P, W), 2)
            for h in range(nh):                                       # static unroll over heads
                base = (h * LL + l) * P
                # grid_sample(align_corners=False): pixel coord = norm * size - 0.5
                x = loc[:, base:base + P] * W - 0.5                    # [tq, P]
                y = loc[:, half + base:half + base + P] * H - 0.5
                aw = attn[:, base:base + P]
                x0 = jnp.floor(x)
                y0 = jnp.floor(y)
                lx = x - x0
                ly = y - y0
                x0i = x0.astype(jnp.int32)
                y0i = y0.astype(jnp.int32)
                # Separable bilinear one-hots; out-of-range corners never match the iota,
                # which implements zero padding for free.
                ry = ((r_iota == y0i[:, :, None]).astype(jnp.float32) * (1.0 - ly)[:, :, None]
                      + (r_iota == y0i[:, :, None] + 1).astype(jnp.float32) * ly[:, :, None])
                cx = ((c_iota == x0i[:, :, None]).astype(jnp.float32) * (1.0 - lx)[:, :, None]
                      + (c_iota == x0i[:, :, None] + 1).astype(jnp.float32) * lx[:, :, None])
                ryw = ry * aw[:, :, None]      # fold attention weights into the row factor
                # A[q, r, c] = sum_p ryw[q, p, r] * cx[q, p, c]   (P-term outer-product, VPU)
                A = jnp.zeros((tq, H, W), jnp.float32)
                for p in range(P):
                    A = A + ryw[:, p, :, None] * cx[:, p, None, :]
                A = A.reshape(tq, HW).astype(agg_dtype)
                accs[h] = accs[h] + jnp.dot(
                    A, v_l[:, h * hd:(h + 1) * hd], preferred_element_type=jnp.float32)
        acc = jnp.concatenate(accs, axis=1)                            # [tq, D]
        # fused output projection: lane-dense [tq, D] store
        y_out = jnp.dot(acc, wout_ref[...].astype(jnp.float32),
                        preferred_element_type=jnp.float32) + bout_ref[...].astype(jnp.float32)
        o_ref[...] = y_out.astype(o_ref.dtype)

    return kernel


def deform_attention(value, loc, attn, out_w, out_b, spatial_shapes_rep,
                     *, nh, hd, P, tq, agg_dtype=jnp.bfloat16):
    """value: [B, Lvp, D]; loc: [B, Lqp, 2*nh*LL*P]; attn: [B, Lqp, nh*LL*P] -> [B, Lqp, D]."""
    B, Lvp, D = value.shape
    _, Lqp, n_off = loc.shape
    n_attn = attn.shape[-1]
    Hs = tuple(int(v) for v in spatial_shapes_rep[:, 0])
    Ws = tuple(int(v) for v in spatial_shapes_rep[:, 1])
    LL = len(Hs)
    sizes = [h * w for h, w in zip(Hs, Ws)]
    starts = tuple(int(v) for v in np.concatenate([[0], np.cumsum(sizes)[:-1]]))
    assert sum(sizes) <= Lvp
    assert Lqp % tq == 0
    kernel = _make_deform_kernel(Hs, Ws, starts, nh, hd, LL, P, agg_dtype)
    return pl.pallas_call(
        kernel,
        out_shape=jax.ShapeDtypeStruct((B, Lqp, D), value.dtype),
        grid=(B, Lqp // tq),
        in_specs=[pl.BlockSpec((None, Lvp, D), lambda b_, q_: (b_, 0, 0)),
                  pl.BlockSpec((None, tq, n_off), lambda b_, q_: (b_, q_, 0)),
                  pl.BlockSpec((None, tq, n_attn), lambda b_, q_: (b_, q_, 0)),
                  pl.BlockSpec((D, D), lambda b_, q_: (0, 0)),
                  pl.BlockSpec((1, D), lambda b_, q_: (0, 0))],
        out_specs=pl.BlockSpec((None, tq, D), lambda b_, q_: (b_, q_, 0)),
        compiler_params=pltpu.CompilerParams(
            dimension_semantics=("parallel", "parallel"),
            vmem_limit_bytes=48 * 1024 * 1024),
    )(value, loc, attn, out_w, out_b.reshape(1, D))


# ------------------------------------- module --------------------------------------
class MultiResMultiFreqDeformCrossAttnPallas:
    def __init__(self, d_model=32, n_levels=2, n_freqs=2, n_heads=4, n_points=4,
                 key=None, agg_dtype=jnp.bfloat16):
        assert d_model % n_heads == 0
        self.d_model = d_model
        self.n_levels = n_levels
        self.n_freqs = n_freqs
        self.n_heads = n_heads
        self.n_points = n_points
        self.agg_dtype = agg_dtype
        LL = n_freqs * n_levels
        n_off = n_heads * LL * n_points * 2
        n_attn = n_heads * LL * n_points
        if key is None:
            key = jax.random.PRNGKey(0)
        ks = jax.random.split(key, 8)

        def init_w(k, shape, fan_in):
            return jax.random.normal(k, shape, jnp.float32) / np.sqrt(fan_in)

        # weights stored [in_features, out_features]
        self.off_w = init_w(ks[0], (d_model, n_off), d_model)
        self.off_b = 0.01 * jax.random.normal(ks[1], (n_off,), jnp.float32)
        self.attn_w = init_w(ks[2], (d_model, n_attn), d_model)
        self.attn_b = 0.01 * jax.random.normal(ks[3], (n_attn,), jnp.float32)
        self.value_w = init_w(ks[4], (d_model, d_model), d_model)
        self.value_b = 0.01 * jax.random.normal(ks[5], (d_model,), jnp.float32)
        self.out_w = init_w(ks[6], (d_model, d_model), d_model)
        self.out_b = 0.01 * jax.random.normal(ks[7], (d_model,), jnp.float32)

        # Fused projection weight: offset columns permuted from the (head, freq*lvl, point, xy)
        # ordering to (xy, head, freq*lvl, point) so x / y become contiguous halves and the
        # deform kernel only needs contiguous width-P lane slices.
        idx = np.arange(n_heads * LL * n_points)
        perm = np.concatenate([2 * idx, 2 * idx + 1])
        self.w_cat = jnp.concatenate([self.off_w[:, perm], self.attn_w], axis=1)
        self.b_cat = jnp.concatenate([self.off_b[perm], self.attn_b], axis=0)
        self.n_off = n_off
        self.n_attn = n_attn

    def __call__(self, query, reference_points, input_flatten, input_spatial_shapes,
                 input_level_start_index=None, input_padding_mask=None):
        # input_level_start_index is recomputed from the (freq-repeated) spatial shapes, exactly
        # as the torch forward does; input_padding_mask is unused by the reference forward path.
        B, Len_q, D = query.shape
        _, N_freq, Len_in, _ = input_flatten.shape
        nh, nl, nf, P = self.n_heads, self.n_levels, self.n_freqs, self.n_points
        hd = D // nh
        LL = nf * nl

        ss = np.asarray(input_spatial_shapes, dtype=np.int64)        # [n_levels, 2] (H, W)
        ss_rep = np.tile(ss, (nf, 1))                                 # [LL, 2]  (freq-major)
        # per-lane 1/normalizer in the permuted (xy, head, lvl, point) layout
        inv_x = np.tile(np.repeat(1.0 / ss_rep[:, 1].astype(np.float64), P), nh)
        inv_y = np.tile(np.repeat(1.0 / ss_rep[:, 0].astype(np.float64), P), nh)
        inv_norm = jnp.asarray(np.concatenate([inv_x, inv_y])[None, :], jnp.float32)

        # query-length tiling (bounds HW-sized intermediates for v7x's 64 MiB VMEM)
        t_q = min(256, _round_up(Len_q, 8))
        Lqp = _round_up(Len_q, t_q)
        q_pad = query if Lqp == Len_q else jnp.pad(query, ((0, 0), (0, Lqp - Len_q), (0, 0)))
        ref2 = reference_points[:, :, 0, :]
        ref_pad = ref2 if Lqp == Len_q else jnp.pad(ref2, ((0, 0), (0, Lqp - Len_q), (0, 0)))

        # value projection, kept in [B, Len_v, D] layout (no host transposes)
        value = batched_matmul_bias(
            input_flatten.reshape(B, N_freq * Len_in, D), self.value_w, self.value_b, tile=512)

        # fused sampling-offset + attention projection (+ locations + per-head softmax)
        loc, attn = fused_query_proj(
            q_pad, ref_pad, self.w_cat, self.b_cat, inv_norm,
            n_off=self.n_off, nh=nh, gp=LL * P, tile=t_q)

        # deformable aggregation with fused output projection
        out = deform_attention(
            value, loc, attn, self.out_w, self.out_b, ss_rep,
            nh=nh, hd=hd, P=P, tq=t_q, agg_dtype=self.agg_dtype)
        return out[:, :Len_q, :]


# ------------------------------ plain-JAX reference -------------------------------
def reference_forward(m, query, reference_points, input_flatten, input_spatial_shapes):
    hi = jax.lax.Precision.HIGHEST
    B, Len_q, D = query.shape
    _, N_freq, Len_in, _ = input_flatten.shape
    nh, nl, nf, P = m.n_heads, m.n_levels, m.n_freqs, m.n_points
    hd = D // nh
    LL = nf * nl

    value = jnp.dot(input_flatten.reshape(-1, D), m.value_w, precision=hi) + m.value_b
    value = value.reshape(B, N_freq * Len_in, nh, hd)
    q2 = query.reshape(-1, D)
    so = (jnp.dot(q2, m.off_w, precision=hi) + m.off_b).reshape(B, Len_q, nh, LL, P, 2)
    aw = jax.nn.softmax(
        (jnp.dot(q2, m.attn_w, precision=hi) + m.attn_b).reshape(B, Len_q, nh, LL * P), -1
    ).reshape(B, Len_q, nh, LL, P)

    ss = np.asarray(input_spatial_shapes, dtype=np.int64)
    normalizer = jnp.asarray(np.tile(np.stack([ss[:, 1], ss[:, 0]], -1), (nf, 1)), jnp.float32)
    ref = reference_points[:, :, 0, :][:, :, None, None, None, :]
    loc = ref + so / normalizer[None, None, None, :, None, :]

    ss_rep = np.tile(ss, (nf, 1))
    sizes = ss_rep[:, 0] * ss_rep[:, 1]
    starts = np.concatenate([[0], np.cumsum(sizes)[:-1]])

    val_t = jnp.transpose(value, (0, 2, 1, 3))                        # [B, nh, Lv, hd]
    out = jnp.zeros((B, nh, Len_q, hd), jnp.float32)
    for l in range(LL):
        H, W, s = int(ss_rep[l, 0]), int(ss_rep[l, 1]), int(starts[l])
        v_l = val_t[:, :, s:s + H * W, :]
        x = loc[:, :, :, l, :, 0] * W - 0.5
        y = loc[:, :, :, l, :, 1] * H - 0.5
        x0 = jnp.floor(x)
        y0 = jnp.floor(y)
        lx, ly = x - x0, y - y0
        x0i, y0i = x0.astype(jnp.int32), y0.astype(jnp.int32)
        aw_l = aw[:, :, :, l, :]
        for dy in (0, 1):
            for dx in (0, 1):
                xi, yi = x0i + dx, y0i + dy
                wx = lx if dx else (1.0 - lx)
                wy = ly if dy else (1.0 - ly)
                valid = ((xi >= 0) & (xi < W) & (yi >= 0) & (yi < H)).astype(jnp.float32)
                idx = jnp.clip(yi * W + xi, 0, H * W - 1)             # [B, Lq, nh, P]
                idx_t = jnp.transpose(idx, (0, 2, 1, 3)).reshape(val_t.shape[0], nh, Len_q * P)
                g = jnp.take_along_axis(v_l, idx_t[..., None], axis=2)
                g = g.reshape(-1, nh, Len_q, P, hd)
                w = jnp.transpose(wx * wy * valid * aw_l, (0, 2, 1, 3))  # [B, nh, Lq, P]
                out = out + jnp.sum(g * w[..., None], axis=3)
    out = jnp.transpose(out, (0, 2, 1, 3)).reshape(B, Len_q, D)
    return jnp.dot(out, m.out_w, precision=hi) + m.out_b


if __name__ == "__main__":
    key = jax.random.PRNGKey(0)
    B, Len_q = 2, 8
    d_model, n_levels, n_freqs, n_heads, n_points = 32, 2, 2, 4, 4
    # non-square levels to exercise the (H, W) / (W, H) conventions
    spatial_shapes = np.array([[8, 16], [4, 8]], dtype=np.int32)
    Len_in = int((spatial_shapes[:, 0] * spatial_shapes[:, 1]).sum())
    level_start = np.concatenate(
        [[0], np.cumsum(spatial_shapes[:, 0] * spatial_shapes[:, 1])[:-1]])

    k_param, kq, kr, kv = jax.random.split(key, 4)
    module = MultiResMultiFreqDeformCrossAttnPallas(
        d_model, n_levels, n_freqs, n_heads, n_points, key=k_param)

    query = jax.random.normal(kq, (B, Len_q, d_model), jnp.float32)
    reference_points = jax.random.uniform(kr, (B, Len_q, 2, 2), dtype=jnp.float32)
    input_flatten = jax.random.normal(kv, (B, n_freqs, Len_in, d_model), jnp.float32)

    out = module(query, reference_points, input_flatten, spatial_shapes, level_start, None)
    out = jax.block_until_ready(out)
    assert out.shape == (B, Len_q, d_model)

    ref = reference_forward(module, query, reference_points, input_flatten, spatial_shapes)
    # Tolerance accommodates bf16 MXU operands in the deformable aggregation (f32 accumulation)
    # and the approximate-reciprocal softmax denominator.  With agg_dtype=jnp.float32 the kernel
    # matches the HIGHEST-precision reference to ~2e-3.
    np.testing.assert_allclose(np.asarray(out), np.asarray(ref), atol=1e-2, rtol=1e-2)
    print("KERNEL_OK")
</pallas_src>

<mosaic_0001>
module attributes {stable_mosaic.version = 11 : i64} {
  func.func @_bmm_bias_kernel(%arg0: i32, %arg1: i32, %arg2: memref<1x320x32xf32, #tpu.memory_space<vmem>>, %arg3: memref<32x32xf32, #tpu.memory_space<vmem>>, %arg4: memref<1x32xf32, #tpu.memory_space<vmem>>, %arg5: memref<1x320x32xf32, #tpu.memory_space<vmem>>) attributes {dimension_semantics = [#tpu.dimension_semantics<parallel>, #tpu.dimension_semantics<parallel>], iteration_bounds = array<i64: 2, 1>, scalar_prefetch = 0 : i64, scratch_operands = 0 : i64, tpu.core_type = #tpu.core_type<tc>, window_params = [{transform_indices = @transform_0, window_bounds = array<i64: 1, 320, 32>}, {pipeline_mode = #tpu.pipeline_mode<synchronous>, transform_indices = @transform_1, window_bounds = array<i64: 32, 32>}, {pipeline_mode = #tpu.pipeline_mode<synchronous>, transform_indices = @transform_2, window_bounds = array<i64: 1, 32>}, {transform_indices = @transform_3, window_bounds = array<i64: 1, 320, 32>}]} {
    %c0 = arith.constant 0 : index
    %c0_0 = arith.constant 0 : index
    %c0_1 = arith.constant 0 : index
    %0 = vector.load %arg2[%c0, %c0_0, %c0_1] : memref<1x320x32xf32, #tpu.memory_space<vmem>>, vector<1x320x32xf32>
    %1 = vector.shape_cast %0 : vector<1x320x32xf32> to vector<320x32xf32>
    %c0_2 = arith.constant 0 : index
    %c0_3 = arith.constant 0 : index
    %2 = vector.load %arg3[%c0_2, %c0_3] : memref<32x32xf32, #tpu.memory_space<vmem>>, vector<32x32xf32>
    %cst = arith.constant dense<0.000000e+00> : vector<320x32xf32>
    %3 = tpu.matmul %1, %2, %cst {dimension_numbers = #tpu.dot_dimension_numbers<[1], [0], [0], [1], [0, 0, 1, 1], [], []>} : vector<320x32xf32>, vector<32x32xf32>, vector<320x32xf32> -> vector<320x32xf32>
    %c0_4 = arith.constant 0 : index
    %c0_5 = arith.constant 0 : index
    %4 = vector.load %arg4[%c0_4, %c0_5] : memref<1x32xf32, #tpu.memory_space<vmem>>, vector<1x32xf32>
    %5 = vector.broadcast %4 : vector<1x32xf32> to vector<320x32xf32>
    %6 = arith.addf %3, %5 : vector<320x32xf32>
    %c0_6 = arith.constant 0 : index
    %c0_7 = arith.constant 0 : index
    %c0_8 = arith.constant 0 : index
    %7 = vector.load %arg5[%c0_6, %c0_7, %c0_8] : memref<1x320x32xf32, #tpu.memory_space<vmem>>, vector<1x320x32xf32>
    %8 = vector.shape_cast %7 : vector<1x320x32xf32> to vector<320x32xf32>
    %9 = vector.shape_cast %6 : vector<320x32xf32> to vector<1x320x32xf32>
    tpu.vector_store %arg5[%c0_6, %c0_7, %c0_8], %9 {strides = array<i32>} : memref<1x320x32xf32, #tpu.memory_space<vmem>>, vector<1x320x32xf32>,
    return
  }
  func.func @transform_0(%arg0: i32, %arg1: i32) -> (i32, i32, i32) {
    %c0_i32 = arith.constant 0 : i32
    %c0_i32_0 = arith.constant 0 : i32
    return %arg0, %arg1, %c0_i32 : i32, i32, i32
  }
  func.func @transform_1(%arg0: i32, %arg1: i32) -> (i32, i32) {
    %c0_i32 = arith.constant 0 : i32
    %c0_i32_0 = arith.constant 0 : i32
    %c0_i32_1 = arith.constant 0 : i32
    return %c0_i32, %c0_i32_0 : i32, i32
  }
  func.func @transform_2(%arg0: i32, %arg1: i32) -> (i32, i32) {
    %c0_i32 = arith.constant 0 : i32
    %c0_i32_0 = arith.constant 0 : i32
    %c0_i32_1 = arith.constant 0 : i32
    return %c0_i32, %c0_i32_0 : i32, i32
  }
  func.func @transform_3(%arg0: i32, %arg1: i32) -> (i32, i32, i32) {
    %c0_i32 = arith.constant 0 : i32
    %c0_i32_0 = arith.constant 0 : i32
    return %arg0, %arg1, %c0_i32 : i32, i32, i32
  }
}

</mosaic_0001>

<llo_original>
// kernel: tpu_custom_call.1
$region0: #{tpu_custom_call.1}
  #allocation0 [shape = 'u32[]', space=smem, size = 0x4, offset = 0x4, fixed_abs, tag = 'smem constant byte address 0x4 - core index']
  #allocation1 [shape = 'u32[72,128]{1,0:T(1,128)}', space=vmem, size = 0x9000, scoped, tag = 'internal scratch']
  %s0 = inlined_call_operand.vmem [shape: f32[2,320,32], index: 0, kind: input, shape index: {}]
  %s1 = inlined_call_operand.vmem [shape: f32[32,32], index: 1, kind: input, shape index: {}]
  %s2 = inlined_call_operand.vmem [shape: f32[1,32], index: 2, kind: input, shape index: {}]
  %s3 = inlined_call_operand.vmem [shape: f32[2,320,32], index: 3, kind: output, shape index: {}]
  %s4 = sld [smem:[#allocation0]]
  $region45: #{tpu_custom_call.1} parent=0
    _
  %s6 = ssub.s32 1, %s4
  %s7 = scalar_select 0, %s6, %s4
  loop: start=0, step=1, limit=4
  $region2: #{tpu_custom_call.1} parent=0 // loop_pre_header
    _
  $region3: #{tpu_custom_call.1} parent=0 // loop_header
    %s9 = sphi 0, %s13
    %p10 = scmp.ge.s32.totalorder %s9, 4
    %s16 = sphi 0, %s28
    %s17 = sphi 0, %s24
    %s18 = sphi 0, %s16
    %s19 = sphi 0, %s17
    %s20 = sphi 0, %s18
    %s21 = sphi 0, %s19
    %s33 = sphi 0, %s35
    %s36 = sphi 0, %s33
    %s37 = sphi 0, %s36
    %s53 = sphi 0, %s37
    %s57 = sphi 0, %s57
    %s59 = sphi 0, %s57
    %s60 = sphi 0, %s59
    %s74 = sphi 0, %s60
    %s78 = sphi 0, %s78
    %s80 = sphi 0, %s78
    %s81 = sphi 0, %s80
    %s95 = sphi 0, %s81
    %s103 = sphi 0, %s105
    %s106 = sphi 0, %s103
    %s107 = sphi 0, %s106
    %s123 = sphi 0, %s107
  $region4: #{tpu_custom_call.1} parent=0 // loop_header_branch
    %12 = sbr.rel (%p10) target = $region8
  $region5: #{tpu_custom_call.1} parent=0 // loop_body
    %s14 = ssub.s32 %s9, 1
    %s15 = ssub.s32 %s9, 2
    %s22 = sadd.s32 1, %s17
    %p23 = scmp.ge.s32.totalorder %s22, 1
    %s24 = scalar_select %p23, 0, %s22
    %s25 = sadd.s32 1, %s16
    %s26 = scalar_select %p23, %s25, %s16
    %p27 = scmp.ge.s32.totalorder %s26, 2
    %s28 = scalar_select %p27, 0, %s26
    %s29 = ssub.s32 %s16, %s28
    %s30 = ssub.s32 %s17, %s24
    %s31 = sor.u32 %s29, %s30
    %p32 = scmp.eq.s32.totalorder %s31, 0
    %s34 = sadd.s32 %s33, 1
    %s35 = scalar_select %p32, %s33, %s34
    %p38 = pneg %p32
    %p39 = scmp.eq.s32.totalorder %s9, 1
    %p40 = por %p38, %p39
    %p41 = scmp.ne.s32.totalorder %s33, %s36
    %p42 = scmp.eq.s32.totalorder %s9, 0
    %p43 = por %p41, %p42
    %p44 = scmp.ne.s32.totalorder %s33, %s36
    %p45 = scmp.eq.s32.totalorder %s14, 1
    %p46 = por %p44, %p45
    %p47 = scmp.ne.s32.totalorder %s36, %s37
    %p48 = scmp.eq.s32.totalorder %s14, 0
    %p49 = por %p47, %p48
    %p50 = scmp.ne.s32.totalorder %s36, %s37
    %p51 = scmp.eq.s32.totalorder %s15, 1
    %p52 = por %p50, %p51
    %p54 = scmp.ne.s32.totalorder %s37, %s53
    %p55 = scmp.eq.s32.totalorder %s15, 0
    %p56 = por %p54, %p55
    %s58 = sadd.s32 %s57, 1
    %p61 = scmp.eq.s32.totalorder %s9, 1
    %p62 = scmp.ne.s32.totalorder %s57, %s59
    %p63 = scmp.eq.s32.totalorder %s9, 0
    %p64 = por %p62, %p63
    %p65 = scmp.ne.s32.totalorder %s57, %s59
    %p66 = scmp.eq.s32.totalorder %s14, 1
    %p67 = por %p65, %p66
    %p68 = scmp.ne.s32.totalorder %s59, %s60
    %p69 = scmp.eq.s32.totalorder %s14, 0
    %p70 = por %p68, %p69
    %p71 = scmp.ne.s32.totalorder %s59, %s60
    %p72 = scmp.eq.s32.totalorder %s15, 1
    %p73 = por %p71, %p72
    %p75 = scmp.ne.s32.totalorder %s60, %s74
    %p76 = scmp.eq.s32.totalorder %s15, 0
    %p77 = por %p75, %p76
    %s79 = sadd.s32 %s78, 1
    %p82 = scmp.eq.s32.totalorder %s9, 1
    %p83 = scmp.ne.s32.totalorder %s78, %s80
    %p84 = scmp.eq.s32.totalorder %s9, 0
    %p85 = por %p83, %p84
    %p86 = scmp.ne.s32.totalorder %s78, %s80
    %p87 = scmp.eq.s32.totalorder %s14, 1
    %p88 = por %p86, %p87
    %p89 = scmp.ne.s32.totalorder %s80, %s81
    %p90 = scmp.eq.s32.totalorder %s14, 0
    %p91 = por %p89, %p90
    %p92 = scmp.ne.s32.totalorder %s80, %s81
    %p93 = scmp.eq.s32.totalorder %s15, 1
    %p94 = por %p92, %p93
    %p96 = scmp.ne.s32.totalorder %s81, %s95
    %p97 = scmp.eq.s32.totalorder %s15, 0
    %p98 = por %p96, %p97
    %s99 = ssub.s32 %s16, %s28
    %s100 = ssub.s32 %s17, %s24
    %s101 = sor.u32 %s99, %s100
    %p102 = scmp.eq.s32.totalorder %s101, 0
    %s104 = sadd.s32 %s103, 1
    %s105 = scalar_select %p102, %s103, %s104
    %p108 = pneg %p102
    %p109 = scmp.eq.s32.totalorder %s9, 1
    %p110 = por %p108, %p109
    %p111 = scmp.ne.s32.totalorder %s103, %s106
    %p112 = scmp.eq.s32.totalorder %s9, 0
    %p113 = por %p111, %p112
    %p114 = scmp.ne.s32.totalorder %s103, %s106
    %p115 = scmp.eq.s32.totalorder %s14, 1
    %p116 = por %p114, %p115
    %p117 = scmp.ne.s32.totalorder %s106, %s107
    %p118 = scmp.eq.s32.totalorder %s14, 0
    %p119 = por %p117, %p118
    %p120 = scmp.ne.s32.totalorder %s106, %s107
    %p121 = scmp.eq.s32.totalorder %s15, 1
    %p122 = por %p120, %p121
    %p124 = scmp.ne.s32.totalorder %s107, %s123
    %p125 = scmp.eq.s32.totalorder %s15, 0
    %p126 = por %p124, %p125
    %p127 = scmp.le.s32.totalorder 1, %s9
    %p128 = scmp.lt.s32.totalorder %s9, 3
    %p129 = pnand %p127, %p128
    %p130 = pneg %p129
    // Predicated region
    $region9: #{tpu_custom_call.1} parent=5 // pred_check
      _
    $region10: #{tpu_custom_call.1} parent=5 // pred_check_branch
      %132 = sbr.rel (%p129) target = $region12
    $region11: #{tpu_custom_call.1} parent=5 // pred_region
      %s133 = ssub.s32 %s9, 1
      // Predicated region
      $region13: #{tpu_custom_call.1} parent=11 // pred_check
        %p134 = pneg %p70
      $region14: #{tpu_custom_call.1} parent=11 // pred_check_branch
        %136 = sbr.rel (%p134) target = $region16
      $region15: #{tpu_custom_call.1} parent=11 // pred_region
        _
      $region16: #{tpu_custom_call.1} parent=11 // pred_fallthru
        _
      // Predicated region
      $region17: #{tpu_custom_call.1} parent=11 // pred_check
        %p137 = pneg %p91
      $region18: #{tpu_custom_call.1} parent=11 // pred_check_branch
        %139 = sbr.rel (%p137) target = $region20
      $region19: #{tpu_custom_call.1} parent=11 // pred_region
        _
      $region20: #{tpu_custom_call.1} parent=11 // pred_fallthru
        _
    $region12: #{tpu_custom_call.1} parent=5 // pred_fallthru
      _
    %p140 = scmp.lt.s32.totalorder %s9, 2
    // Predicated region
    $region21: #{tpu_custom_call.1} parent=5 // pred_check
      %p141 = pneg %p140
    $region22: #{tpu_custom_call.1} parent=5 // pred_check_branch
      %143 = sbr.rel (%p141) target = $region24
    $region23: #{tpu_custom_call.1} parent=5 // pred_region
      // Predicated region
      $region25: #{tpu_custom_call.1} parent=23 // pred_check
        %p144 = pneg %p43
      $region26: #{tpu_custom_call.1} parent=23 // pred_check_branch
        %146 = sbr.rel (%p144) target = $region28
      $region27: #{tpu_custom_call.1} parent=23 // pred_region
        %s147 = smul.u32 40, %s17
        %p148 = scmp.lt.s32.totalorder %s16, 1
        %s149 = scalar_select %p148, %s16, 1
        %p150 = scmp.lt.s32.totalorder %s147, 39
        %s151 = scalar_select %p150, %s147, 39
        %s152 = smul.addr %s149, 40
        %s153 = sadd.s32 %s151, %s152
        %s154 = smul.addr %s153, 8
        %s155 = scalar_lea.vmem %s0, %s154
        %s156 = smul.u32 40, %s17
      $region28: #{tpu_custom_call.1} parent=23 // pred_fallthru
        _
    $region24: #{tpu_custom_call.1} parent=5 // pred_fallthru
      _
    %p157 = scmp.le.s32.totalorder 1, %s9
    %p158 = scmp.lt.s32.totalorder %s9, 3
    %p159 = pnand %p157, %p158
    %p160 = pneg %p159
    // Predicated region
    $region29: #{tpu_custom_call.1} parent=5 // pred_check
      _
    $region30: #{tpu_custom_call.1} parent=5 // pred_check_branch
      %162 = sbr.rel (%p159) target = $region32
    $region31: #{tpu_custom_call.1} parent=5 // pred_region
      %s163 = ssub.s32 %s9, 1
      %s164 = smul.u32 40, %s19
      %p165 = scmp.lt.s32.totalorder %s18, 1
      %s166 = scalar_select %p165, %s18, 1
      %p167 = scmp.lt.s32.totalorder %s164, 39
      %s168 = scalar_select %p167, %s164, 39
      %s169 = smul.addr %s166, 40
      %s170 = sadd.s32 %s168, %s169
      %s171 = smul.addr %s170, 8
      %s172 = scalar_lea.vmem %s0, %s171
      %p173 = pneg %p49
      %p174 = pneg %p46
      %p175 = pneg %p70
      %p176 = pneg %p67
      %p177 = pneg %p91
      %p178 = pneg %p88
      %p179 = pneg %p119
      %p180 = pneg %p116
      %s181 = smul.u32 40, %s19
      %p182 = scmp.lt.s32.totalorder %s18, 1
      %s183 = scalar_select %p182, %s18, 1
      %p184 = scmp.lt.s32.totalorder %s181, 39
      %s185 = scalar_select %p184, %s181, 39
      %s186 = smul.addr %s183, 40
      %s187 = sadd.s32 %s185, %s186
      %s188 = smul.addr %s187, 8
      %s189 = scalar_lea.vmem %s3, %s188
      %s190 = smul.u32 40, %s19
      %p191 = scmp.lt.s32.totalorder %s18, 1
      %s192 = scalar_select %p191, %s18, 1
      %p193 = scmp.lt.s32.totalorder %s190, 39
      %s194 = scalar_select %p193, %s190, 39
      %s195 = smul.addr %s192, 40
      %s196 = sadd.s32 %s194, %s195
      %s197 = smul.addr %s196, 8
      %s198 = scalar_lea.vmem %s0, %s197
      %s199 = smul.u32 40, %s19
      %s200 = smul.u32 40, %s19
      %p201 = scmp.lt.s32.totalorder %s18, 1
      %s202 = scalar_select %p201, %s18, 1
      %p203 = scmp.lt.s32.totalorder %s200, 39
      %s204 = scalar_select %p203, %s200, 39
      %s205 = smul.addr %s202, 40
      %s206 = sadd.s32 %s204, %s205
      %s207 = smul.addr %s206, 8
      %s208 = scalar_lea.vmem %s3, %s207
      %s209 = smul.u32 40, %s19
      %v210 = vld [vmem:[%s198] sm:$0xff]
      %v211 = vld [vmem:[%s198 + $0x8] sm:$0xff]
      %v212 = vld [vmem:[%s198 + $0x10] sm:$0xff]
      %v213 = vld [vmem:[%s198 + $0x18] sm:$0xff]
      %v214 = vld [vmem:[%s198 + $0x20] sm:$0xff]
      %v215 = vld [vmem:[%s198 + $0x28] sm:$0xff]
      %v216 = vld [vmem:[%s198 + $0x30] sm:$0xff]
      %v217 = vld [vmem:[%s198 + $0x38] sm:$0xff]
      %v218 = vld [vmem:[%s198 + $0x40] sm:$0xff]
      %v219 = vld [vmem:[%s198 + $0x48] sm:$0xff]
      %v220 = vld [vmem:[%s198 + $0x50] sm:$0xff]
      %v221 = vld [vmem:[%s198 + $0x58] sm:$0xff]
      %v222 = vld [vmem:[%s198 + $0x60] sm:$0xff]
      %v223 = vld [vmem:[%s198 + $0x68] sm:$0xff]
      %v224 = vld [vmem:[%s198 + $0x70] sm:$0xff]
      %v225 = vld [vmem:[%s198 + $0x78] sm:$0xff]
      %v226 = vld [vmem:[%s198 + $0x80] sm:$0xff]
      %v227 = vld [vmem:[%s198 + $0x88] sm:$0xff]
      %v228 = vld [vmem:[%s198 + $0x90] sm:$0xff]
      %v229 = vld [vmem:[%s198 + $0x98] sm:$0xff]
      %v230 = vld [vmem:[%s198 + $0xa0] sm:$0xff]
      %v231 = vld [vmem:[%s198 + $0xa8] sm:$0xff]
      %v232 = vld [vmem:[%s198 + $0xb0] sm:$0xff]
      %v233 = vld [vmem:[%s198 + $0xb8] sm:$0xff]
      %v234 = vld [vmem:[%s198 + $0xc0] sm:$0xff]
      %v235 = vld [vmem:[%s198 + $0xc8] sm:$0xff]
      %v236 = vld [vmem:[%s198 + $0xd0] sm:$0xff]
      %v237 = vld [vmem:[%s198 + $0xd8] sm:$0xff]
      %v238 = vld [vmem:[%s198 + $0xe0] sm:$0xff]
      %v239 = vld [vmem:[%s198 + $0xe8] sm:$0xff]
      %v240 = vld [vmem:[%s198 + $0xf0] sm:$0xff]
      %v241 = vld [vmem:[%s198 + $0xf8] sm:$0xff]
      %v242 = vld [vmem:[%s198 + $0x100] sm:$0xff]
      %v243 = vld [vmem:[%s198 + $0x108] sm:$0xff]
      %v244 = vld [vmem:[%s198 + $0x110] sm:$0xff]
      %v245 = vld [vmem:[%s198 + $0x118] sm:$0xff]
      %v246 = vld [vmem:[%s198 + $0x120] sm:$0xff]
      %v247 = vld [vmem:[%s198 + $0x128] sm:$0xff]
      %v248 = vld [vmem:[%s198 + $0x130] sm:$0xff]
      %v249 = vld [vmem:[%s198 + $0x138] sm:$0xff]
      %v250 = vld [vmem:[%s1] sm:$0xff]
      %v251 = vld [vmem:[%s1 + $0x8] sm:$0xff]
      %v252 = vld [vmem:[%s1 + $0x10] sm:$0xff]
      %v253 = vld [vmem:[%s1 + $0x18] sm:$0xff]
      %v254 = vld [vmem:[%s2] sm:$0x1]
      %v256 = vperm.slane %v254, 0
      %vm258 = vcmask 261120
      %v260 = vsel %vm258, %v210, 0
      %v263 = vsel %vm258, %v211, 0
      %v266 = vsel %vm258, %v212, 0
      %v269 = vsel %vm258, %v213, 0
      %v272 = vsel %vm258, %v214, 0
      %v275 = vsel %vm258, %v215, 0
      %v278 = vsel %vm258, %v216, 0
      %v281 = vsel %vm258, %v217, 0
      %v284 = vsel %vm258, %v218, 0
      %v287 = vsel %vm258, %v219, 0
      %v290 = vsel %vm258, %v220, 0
      %v293 = vsel %vm258, %v221, 0
      %v296 = vsel %vm258, %v222, 0
      %v299 = vsel %vm258, %v223, 0
      %v302 = vsel %vm258, %v224, 0
      %v305 = vsel %vm258, %v225, 0
      %v308 = vsel %vm258, %v226, 0
      %v311 = vsel %vm258, %v227, 0
      %v314 = vsel %vm258, %v228, 0
      %v317 = vsel %vm258, %v229, 0
      %v320 = vsel %vm258, %v230, 0
      %v323 = vsel %vm258, %v231, 0
      %v326 = vsel %vm258, %v232, 0
      %v329 = vsel %vm258, %v233, 0
      %v332 = vsel %vm258, %v234, 0
      %v335 = vsel %vm258, %v235, 0
      %v338 = vsel %vm258, %v236, 0
      %v341 = vsel %vm258, %v237, 0
      %v344 = vsel %vm258, %v238, 0
      %v347 = vsel %vm258, %v239, 0
      %v350 = vsel %vm258, %v240, 0
      %v353 = vsel %vm258, %v241, 0
      %v356 = vsel %vm258, %v242, 0
      %v359 = vsel %vm258, %v243, 0
      %v362 = vsel %vm258, %v244, 0
      %v365 = vsel %vm258, %v245, 0
      %v368 = vsel %vm258, %v246, 0
      %v371 = vsel %vm258, %v247, 0
      %v374 = vsel %vm258, %v248, 0
      %v377 = vsel %vm258, %v249, 0
      %379 = vmatpush.msra.mxu0 0.0
      %380 = vmatpush.msra.mxu0 0.0
      %381 = vmatpush.msra.mxu0 0.0
      %382 = vmatpush.msra.mxu0 0.0
      %383 = vmatpush.msra.mxu0 0.0
      %384 = vmatpush.msra.mxu0 0.0
      %385 = vmatpush.msra.mxu0 0.0
      %386 = vmatpush.msra.mxu0 0.0
      %387 = vmatpush.msra.mxu0 0.0
      %388 = vmatpush.msra.mxu0 0.0
      %389 = vmatpush.msra.mxu0 0.0
      %390 = vmatpush.msra.mxu0 0.0
      %391 = vmatpush.msra.mxu0 %v253
      %392 = vmatpush.msra.mxu0 %v252
      %393 = vmatpush.msra.mxu0 %v251
      %394 = vmatpush.msra.mxu0 %v250
      %395 = vmatmul.f32.gmra.mxu0 %v260
      %v396 = vpop.f32.mrf.mxu0
      %v397 = vadd.f32 %v256, %v396
      %398 = vmatmul.f32.gmra.mxu0 %v263
      %v399 = vpop.f32.mrf.mxu0
      %v400 = vadd.f32 %v256, %v399
      %401 = vmatmul.f32.gmra.mxu0 %v266
      %v402 = vpop.f32.mrf.mxu0
      %v403 = vadd.f32 %v256, %v402
      %404 = vmatmul.f32.gmra.mxu0 %v269
      %v405 = vpop.f32.mrf.mxu0
      %v406 = vadd.f32 %v256, %v405
      %407 = vmatmul.f32.gmra.mxu0 %v272
      %v408 = vpop.f32.mrf.mxu0
      %v409 = vadd.f32 %v256, %v408
      %410 = vmatmul.f32.gmra.mxu0 %v275
      %v411 = vpop.f32.mrf.mxu0
      %v412 = vadd.f32 %v256, %v411
      %413 = vmatmul.f32.gmra.mxu0 %v278
      %v414 = vpop.f32.mrf.mxu0
      %v415 = vadd.f32 %v256, %v414
      %416 = vmatmul.f32.gmra.mxu0 %v281
      %v417 = vpop.f32.mrf.mxu0
      %v418 = vadd.f32 %v256, %v417
      %419 = vmatmul.f32.gmra.mxu0 %v284
      %v420 = vpop.f32.mrf.mxu0
      %v421 = vadd.f32 %v256, %v420
      %422 = vmatmul.f32.gmra.mxu0 %v287
      %v423 = vpop.f32.mrf.mxu0
      %v424 = vadd.f32 %v256, %v423
      %425 = vmatmul.f32.gmra.mxu0 %v290
      %v426 = vpop.f32.mrf.mxu0
      %v427 = vadd.f32 %v256, %v426
      %428 = vmatmul.f32.gmra.mxu0 %v293
      %v429 = vpop.f32.mrf.mxu0
      %v430 = vadd.f32 %v256, %v429
      %431 = vmatmul.f32.gmra.mxu0 %v296
      %v432 = vpop.f32.mrf.mxu0
      %v433 = vadd.f32 %v256, %v432
      %434 = vmatmul.f32.gmra.mxu0 %v299
      %v435 = vpop.f32.mrf.mxu0
      %v436 = vadd.f32 %v256, %v435
      %437 = vmatmul.f32.gmra.mxu0 %v302
      %v438 = vpop.f32.mrf.mxu0
      %v439 = vadd.f32 %v256, %v438
      %440 = vmatmul.f32.gmra.mxu0 %v305
      %v441 = vpop.f32.mrf.mxu0
      %v442 = vadd.f32 %v256, %v441
      %443 = vmatmul.f32.gmra.mxu0 %v308
      %v444 = vpop.f32.mrf.mxu0
      %v445 = vadd.f32 %v256, %v444
      %446 = vmatmul.f32.gmra.mxu0 %v311
      %v447 = vpop.f32.mrf.mxu0
      %v448 = vadd.f32 %v256, %v447
      %449 = vmatmul.f32.gmra.mxu0 %v314
      %v450 = vpop.f32.mrf.mxu0
      %v451 = vadd.f32 %v256, %v450
      %452 = vmatmul.f32.gmra.mxu0 %v317
      %v453 = vpop.f32.mrf.mxu0
      %v454 = vadd.f32 %v256, %v453
      %455 = vmatmul.f32.gmra.mxu0 %v320
      %v456 = vpop.f32.mrf.mxu0
      %v457 = vadd.f32 %v256, %v456
      %458 = vmatmul.f32.gmra.mxu0 %v323
      %v459 = vpop.f32.mrf.mxu0
      %v460 = vadd.f32 %v256, %v459
      %461 = vmatmul.f32.gmra.mxu0 %v326
      %v462 = vpop.f32.mrf.mxu0
      %v463 = vadd.f32 %v256, %v462
      %464 = vmatmul.f32.gmra.mxu0 %v329
      %v465 = vpop.f32.mrf.mxu0
      %v466 = vadd.f32 %v256, %v465
      %467 = vmatmul.f32.gmra.mxu0 %v332
      %v468 = vpop.f32.mrf.mxu0
      %v469 = vadd.f32 %v256, %v468
      %470 = vmatmul.f32.gmra.mxu0 %v335
      %v471 = vpop.f32.mrf.mxu0
      %v472 = vadd.f32 %v256, %v471
      %473 = vmatmul.f32.gmra.mxu0 %v338
      %v474 = vpop.f32.mrf.mxu0
      %v475 = vadd.f32 %v256, %v474
      %476 = vmatmul.f32.gmra.mxu0 %v341
      %v477 = vpop.f32.mrf.mxu0
      %v478 = vadd.f32 %v256, %v477
      %479 = vmatmul.f32.gmra.mxu0 %v344
      %v480 = vpop.f32.mrf.mxu0
      %v481 = vadd.f32 %v256, %v480
      %482 = vmatmul.f32.gmra.mxu0 %v347
      %v483 = vpop.f32.mrf.mxu0
      %v484 = vadd.f32 %v256, %v483
      %485 = vmatmul.f32.gmra.mxu0 %v350
      %v486 = vpop.f32.mrf.mxu0
      %v487 = vadd.f32 %v256, %v486
      %488 = vmatmul.f32.gmra.mxu0 %v353
      %v489 = vpop.f32.mrf.mxu0
      %v490 = vadd.f32 %v256, %v489
      %491 = vmatmul.f32.gmra.mxu0 %v356
      %v492 = vpop.f32.mrf.mxu0
      %v493 = vadd.f32 %v256, %v492
      %494 = vmatmul.f32.gmra.mxu0 %v359
      %v495 = vpop.f32.mrf.mxu0
      %v496 = vadd.f32 %v256, %v495
      %497 = vmatmul.f32.gmra.mxu0 %v362
      %v498 = vpop.f32.mrf.mxu0
      %v499 = vadd.f32 %v256, %v498
      %500 = vmatmul.f32.gmra.mxu0 %v365
      %v501 = vpop.f32.mrf.mxu0
      %v502 = vadd.f32 %v256, %v501
      %503 = vmatmul.f32.gmra.mxu0 %v368
      %v504 = vpop.f32.mrf.mxu0
      %v505 = vadd.f32 %v256, %v504
      %506 = vmatmul.f32.gmra.mxu0 %v371
      %v507 = vpop.f32.mrf.mxu0
      %v508 = vadd.f32 %v256, %v507
      %509 = vmatmul.f32.gmra.mxu0 %v374
      %v510 = vpop.f32.mrf.mxu0
      %v511 = vadd.f32 %v256, %v510
      %512 = vmatmul.f32.gmra.mxu0 %v377
      %v513 = vpop.f32.mrf.mxu0
      %v514 = vadd.f32 %v256, %v513
      %515 = vdwg.mxu0
      %516 = vst.msk [vmem:[%s208] sm:$0xff] %vm258, %v397
      %517 = vst.msk [vmem:[%s208 + $0x8] sm:$0xff] %vm258, %v400
      %518 = vst.msk [vmem:[%s208 + $0x10] sm:$0xff] %vm258, %v403
      %519 = vst.msk [vmem:[%s208 + $0x18] sm:$0xff] %vm258, %v406
      %520 = vst.msk [vmem:[%s208 + $0x20] sm:$0xff] %vm258, %v409
      %521 = vst.msk [vmem:[%s208 + $0x28] sm:$0xff] %vm258, %v412
      %522 = vst.msk [vmem:[%s208 + $0x30] sm:$0xff] %vm258, %v415
      %523 = vst.msk [vmem:[%s208 + $0x38] sm:$0xff] %vm258, %v418
      %524 = vst.msk [vmem:[%s208 + $0x40] sm:$0xff] %vm258, %v421
      %525 = vst.msk [vmem:[%s208 + $0x48] sm:$0xff] %vm258, %v424
      %526 = vst.msk [vmem:[%s208 + $0x50] sm:$0xff] %vm258, %v427
      %527 = vst.msk [vmem:[%s208 + $0x58] sm:$0xff] %vm258, %v430
      %528 = vst.msk [vmem:[%s208 + $0x60] sm:$0xff] %vm258, %v433
      %529 = vst.msk [vmem:[%s208 + $0x68] sm:$0xff] %vm258, %v436
      %530 = vst.msk [vmem:[%s208 + $0x70] sm:$0xff] %vm258, %v439
      %531 = vst.msk [vmem:[%s208 + $0x78] sm:$0xff] %vm258, %v442
      %532 = vst.msk [vmem:[%s208 + $0x80] sm:$0xff] %vm258, %v445
      %533 = vst.msk [vmem:[%s208 + $0x88] sm:$0xff] %vm258, %v448
      %534 = vst.msk [vmem:[%s208 + $0x90] sm:$0xff] %vm258, %v451
      %535 = vst.msk [vmem:[%s208 + $0x98] sm:$0xff] %vm258, %v454
      %536 = vst.msk [vmem:[%s208 + $0xa0] sm:$0xff] %vm258, %v457
      %537 = vst.msk [vmem:[%s208 + $0xa8] sm:$0xff] %vm258, %v460
      %538 = vst.msk [vmem:[%s208 + $0xb0] sm:$0xff] %vm258, %v463
      %539 = vst.msk [vmem:[%s208 + $0xb8] sm:$0xff] %vm258, %v466
      %540 = vst.msk [vmem:[%s208 + $0xc0] sm:$0xff] %vm258, %v469
      %541 = vst.msk [vmem:[%s208 + $0xc8] sm:$0xff] %vm258, %v472
      %542 = vst.msk [vmem:[%s208 + $0xd0] sm:$0xff] %vm258, %v475
      %543 = vst.msk [vmem:[%s208 + $0xd8] sm:$0xff] %vm258, %v478
      %544 = vst.msk [vmem:[%s208 + $0xe0] sm:$0xff] %vm258, %v481
      %545 = vst.msk [vmem:[%s208 + $0xe8] sm:$0xff] %vm258, %v484
      %546 = vst.msk [vmem:[%s208 + $0xf0] sm:$0xff] %vm258, %v487
      %547 = vst.msk [vmem:[%s208 + $0xf8] sm:$0xff] %vm258, %v490
      %548 = vst.msk [vmem:[%s208 + $0x100] sm:$0xff] %vm258, %v493
      %549 = vst.msk [vmem:[%s208 + $0x108] sm:$0xff] %vm258, %v496
      %550 = vst.msk [vmem:[%s208 + $0x110] sm:$0xff] %vm258, %v499
      %551 = vst.msk [vmem:[%s208 + $0x118] sm:$0xff] %vm258, %v502
      %552 = vst.msk [vmem:[%s208 + $0x120] sm:$0xff] %vm258, %v505
      %553 = vst.msk [vmem:[%s208 + $0x128] sm:$0xff] %vm258, %v508
      %554 = vst.msk [vmem:[%s208 + $0x130] sm:$0xff] %vm258, %v511
      %555 = vst.msk [vmem:[%s208 + $0x138] sm:$0xff] %vm258, %v514
      %s556 = smul.u32 40, %s19
      %p557 = scmp.lt.s32.totalorder %s18, 1
      %s558 = scalar_select %p557, %s18, 1
      %p559 = scmp.lt.s32.totalorder %s556, 39
      %s560 = scalar_select %p559, %s556, 39
      %s561 = smul.addr %s558, 40
      %s562 = sadd.s32 %s560, %s561
      %s563 = smul.addr %s562, 8
      %s564 = scalar_lea.vmem %s3, %s563
      // Predicated region
      $region33: #{tpu_custom_call.1} parent=31 // pred_check
        %p565 = pneg %p116
      $region34: #{tpu_custom_call.1} parent=31 // pred_check_branch
        %567 = sbr.rel (%p565) target = $region36
      $region35: #{tpu_custom_call.1} parent=31 // pred_region
        %s568 = smul.u32 40, %s19
      $region36: #{tpu_custom_call.1} parent=31 // pred_fallthru
        _
    $region32: #{tpu_custom_call.1} parent=5 // pred_fallthru
      _
    %p569 = scmp.le.s32.totalorder 2, %s9
    // Predicated region
    $region37: #{tpu_custom_call.1} parent=5 // pred_check
      %p570 = pneg %p569
    $region38: #{tpu_custom_call.1} parent=5 // pred_check_branch
      %572 = sbr.rel (%p570) target = $region40
    $region39: #{tpu_custom_call.1} parent=5 // pred_region
      %s573 = ssub.s32 %s9, 2
      // Predicated region
      $region41: #{tpu_custom_call.1} parent=39 // pred_check
        %p574 = pneg %p122
      $region42: #{tpu_custom_call.1} parent=39 // pred_check_branch
        %576 = sbr.rel (%p574) target = $region44
      $region43: #{tpu_custom_call.1} parent=39 // pred_region
        %s577 = smul.u32 40, %s21
        %p578 = scmp.lt.s32.totalorder %s20, 1
        %s579 = scalar_select %p578, %s20, 1
        %p580 = scmp.lt.s32.totalorder %s577, 39
        %s581 = scalar_select %p580, %s577, 39
        %s582 = smul.addr %s579, 40
        %s583 = sadd.s32 %s581, %s582
        %s584 = smul.addr %s583, 8
        %s585 = scalar_lea.vmem %s3, %s584
      $region44: #{tpu_custom_call.1} parent=39 // pred_fallthru
        _
    $region40: #{tpu_custom_call.1} parent=5 // pred_fallthru
      _
  $region6: #{tpu_custom_call.1} parent=0 // loop_footer
    %s13 = sadd.s32 1, %s9
  $region7: #{tpu_custom_call.1} parent=0 // loop_footer_branch
    %8 = sbr.rel target = $region3
  $region8: #{tpu_custom_call.1} parent=0 // loop_exit
    _

</llo_original>
